<compile_context>
chip_gen: v7x
topology: tpu7x:2x2x1
jax: 0.10.0
libtpu: 0.0.40
codegen_flags: <defaults>
</compile_context>

<pallas_src>
import jax
import jax.numpy as jnp
from jax.experimental import pallas as pl
from jax.experimental.pallas import tpu as pltpu


def _cdiv(a, b):
    return -(-a // b)


def _round_up(x, m):
    return _cdiv(x, m) * m


def _vmem_budget_bytes():
    """Generation-aware VMEM budget (~75% of physical per-core VMEM)."""
    try:
        cap = pltpu.get_tpu_info().vmem_capacity_bytes
    except Exception:
        cap = 128 * 1024 * 1024  # v5e/v6e physical; conservative fallback
    return int(cap) * 3 // 4     # ~96 MiB on v5e/v6e, ~48 MiB on v7x


def _fused_linear_relu_kernel(x_ref, w_ref, b_ref, o_ref, acc_ref):
    # x_ref: (TB, TK) bf16, w_ref: (TK, Dp) bf16, b_ref: (1, Dp) f32,
    # o_ref: (TB, Dp) f32, acc_ref: (TB, Dp) f32 scratch.
    k = pl.program_id(1)

    @pl.when(k == 0)
    def _init():
        acc_ref[...] = jnp.zeros_like(acc_ref)

    acc_ref[...] += jnp.dot(x_ref[...], w_ref[...],
                            preferred_element_type=jnp.float32)

    @pl.when(k == pl.num_programs(1) - 1)
    def _finalize():
        o_ref[...] = jnp.maximum(acc_ref[...] + b_ref[...], 0.0).astype(
            o_ref.dtype)


def prepare_attention_fusion_params(w, b):
    """Pad + cast the static parameters ONCE (reuse across forward calls).

    w: (N*D, D) -- transpose of the PyTorch (D, N*D) weight.  b: (D,).
    """
    K, D = w.shape
    Kp = _round_up(K, 128)
    Dp = _round_up(D, 128)
    w_p = w.astype(jnp.bfloat16)
    if (Kp, Dp) != (K, D):
        w_p = jnp.pad(w_p, ((0, Kp - K), (0, Dp - D)))
    b_p = b.astype(jnp.float32)
    if Dp != D:
        b_p = jnp.pad(b_p, (0, Dp - D))
    b_p = b_p.reshape(1, Dp)
    return {"w_p": w_p, "b_p": b_p, "K": K, "D": D}


def _select_tiles(B, Kp, Dp, max_tb, budget):
    """Pick (TB, TK, nk) so the working set fits the per-core VMEM budget."""
    # --- K tiling: keep the whole weight resident only when even a
    # double-buffered copy fits half the budget; otherwise stream K tiles.
    weight_budget = budget // 2
    if 2 * Kp * Dp * 2 <= weight_budget:
        TK = Kp
    else:
        TK = max(128, (weight_budget // (2 * Dp * 2)) // 128 * 128)
        while Kp % TK:          # Kp is a multiple of 128, so this terminates
            TK -= 128
        TK = max(TK, 128)
    nk = Kp // TK

    # --- Balanced batch tiling (caps padding waste at < 8 rows per tile).
    nb = max(1, _cdiv(B, max_tb))
    TB = _round_up(_cdiv(B, nb), 8)
    # v7x megacore: give the "parallel" batch axis >= 2 steps when there is
    # enough work to split.
    if _cdiv(B, TB) == 1 and TB >= 16:
        TB = _round_up(_cdiv(B, 2), 8)

    def fits(tb):
        x_bytes = 2 * tb * TK * 2          # bf16 x, double-buffered
        w_bytes = 2 * TK * Dp * 2          # bf16 w (conservatively 2 bufs)
        o_bytes = 2 * tb * Dp * 4          # f32 out, double-buffered
        acc_bytes = tb * Dp * 4            # f32 accumulator scratch
        b_bytes = 2 * Dp * 4               # f32 bias
        return x_bytes + w_bytes + o_bytes + acc_bytes + b_bytes <= budget

    while TB > 8 and not fits(TB):
        TB = _round_up(TB // 2, 8)
    return TB, TK, nk


def attention_fusion_forward(x, params, *, max_tb=512):
    """x: (B, N, D) -> ReLU(x.view(B, -1) @ W + b): (B, D)."""
    B, N, D_in = x.shape
    K = N * D_in
    assert K == params["K"], (K, params["K"])
    D = params["D"]
    w_p, b_p = params["w_p"], params["b_p"]
    Kp, Dp = w_p.shape

    budget = _vmem_budget_bytes()
    TB, TK, nk = _select_tiles(B, Kp, Dp, max_tb, budget)
    nb = _cdiv(B, TB)
    Bp = nb * TB

    # x staging: one bf16 cast; a single jnp.pad only when geometry differs.
    x_flat = x.reshape(B, K).astype(jnp.bfloat16)   # glue: == x.view(B, -1)
    if (Bp, Kp) != (B, K):
        x_flat = jnp.pad(x_flat, ((0, Bp - B), (0, Kp - K)))

    cost = pl.CostEstimate(
        flops=2 * Bp * Kp * Dp,
        transcendentals=0,
        bytes_accessed=2 * (Bp * Kp + Kp * Dp) + 4 * (Dp + Bp * Dp),
    )

    def run(use_buffered):
        if use_buffered and nk == 1:
            w_spec = pl.BlockSpec((TK, Dp), lambda i, k: (k, 0),
                                  pipeline_mode=pl.Buffered(1))
        else:
            w_spec = pl.BlockSpec((TK, Dp), lambda i, k: (k, 0))
        if use_buffered:
            b_spec = pl.BlockSpec((1, Dp), lambda i, k: (0, 0),
                                  pipeline_mode=pl.Buffered(1))
        else:
            b_spec = pl.BlockSpec((1, Dp), lambda i, k: (0, 0))
        return pl.pallas_call(
            _fused_linear_relu_kernel,
            out_shape=jax.ShapeDtypeStruct((Bp, Dp), jnp.float32),
            grid_spec=pltpu.PrefetchScalarGridSpec(
                num_scalar_prefetch=0,
                grid=(nb, nk),
                in_specs=[
                    pl.BlockSpec((TB, TK), lambda i, k: (i, k)),  # x stream
                    w_spec,                                       # weight
                    b_spec,                                       # bias
                ],
                out_specs=pl.BlockSpec((TB, Dp), lambda i, k: (i, 0)),
                scratch_shapes=[pltpu.VMEM((TB, Dp), jnp.float32)],
            ),
            compiler_params=pltpu.CompilerParams(
                dimension_semantics=("parallel", "arbitrary"),
                vmem_limit_bytes=budget,
            ),
            cost_estimate=cost,
        )(x_flat, w_p, b_p)

    try:
        out_p = run(use_buffered=True)
    except Exception:
        # Installed Pallas rejects single-buffered blocks: fall back to
        # default double-buffering (correctness unaffected).
        out_p = run(use_buffered=False)

    out = out_p
    if (Bp, Dp) != (B, D):
        out = out[:B, :D]          # strip padding (zero pads are inert)
    if out.dtype != x.dtype:
        out = out.astype(x.dtype)
    return out


def reference_forward(x, w, b):
    """Pure-JAX reference with the same bf16 rounding / f32 accumulation."""
    B, N, D = x.shape
    x_flat = x.reshape(B, N * D)
    xw = jnp.dot(x_flat.astype(jnp.bfloat16).astype(jnp.float32),
                 w.astype(jnp.bfloat16).astype(jnp.float32))
    return jnp.maximum(xw + b[None, :].astype(jnp.float32), 0.0)


if __name__ == "__main__":
    # Small shapes consistent with the module: dim=32, num_inputs=4, batch=2.
    B, N, D = 2, 4, 32
    K = N * D

    key = jax.random.PRNGKey(0)
    kx, kw, kb = jax.random.split(key, 3)

    x = jax.random.normal(kx, (B, N, D), dtype=jnp.float32)

    # Deterministic PyTorch-Linear-style uniform init, bound = 1/sqrt(K).
    bound = 1.0 / (K ** 0.5)
    # PyTorch stores weight as (D, K); kernel uses (K, D).
    w_pt = jax.random.uniform(kw, (D, K), minval=-bound, maxval=bound,
                              dtype=jnp.float32)
    b = jax.random.uniform(kb, (D,), minval=-bound, maxval=bound,
                           dtype=jnp.float32)
    w = w_pt.T

    params = prepare_attention_fusion_params(w, b)   # hoisted param prep
    out = attention_fusion_forward(x, params)
    out = jax.block_until_ready(out)

    ref = reference_forward(x, w, b)
    assert out.shape == (B, D), out.shape
    assert jnp.allclose(out, ref, atol=1e-3, rtol=1e-3), "mismatch vs reference"

    print("KERNEL_OK")
</pallas_src>

<mosaic_0001>
module attributes {stable_mosaic.version = 11 : i64} {
  func.func @_fused_linear_relu_kernel(%arg0: i32, %arg1: i32, %arg2: memref<8x128xbf16, #tpu.memory_space<vmem>>, %arg3: memref<128x128xbf16, #tpu.memory_space<vmem>>, %arg4: memref<1x128xf32, #tpu.memory_space<vmem>>, %arg5: memref<8x128xf32, #tpu.memory_space<vmem>>, %arg6: memref<8x128xf32, #tpu.memory_space<vmem>>) attributes {dimension_semantics = [#tpu.dimension_semantics<parallel>, #tpu.dimension_semantics<arbitrary>], iteration_bounds = array<i64: 1, 1>, scalar_prefetch = 0 : i64, scratch_operands = 1 : i64, tpu.core_type = #tpu.core_type<tc>, window_params = [{transform_indices = @transform_0, window_bounds = array<i64: 8, 128>}, {pipeline_mode = #tpu.pipeline_mode<synchronous>, transform_indices = @transform_1, window_bounds = array<i64: 128, 128>}, {pipeline_mode = #tpu.pipeline_mode<synchronous>, transform_indices = @transform_2, window_bounds = array<i64: 1, 128>}, {transform_indices = @transform_3, window_bounds = array<i64: 8, 128>}]} {
    %c0_i32 = arith.constant 0 : i32
    %0 = arith.cmpi eq, %arg1, %c0_i32 : i32
    %1 = arith.extui %0 : i1 to i32
    %c0_i32_0 = arith.constant 0 : i32
    %2 = arith.cmpi ne, %1, %c0_i32_0 : i32
    scf.if %2 {
      %cst_10 = arith.constant 0.000000e+00 : f32
      %12 = vector.broadcast %cst_10 : f32 to vector<8x128xf32>
      %c0_11 = arith.constant 0 : index
      %c0_12 = arith.constant 0 : index
      %13 = vector.load %arg6[%c0_11, %c0_12] : memref<8x128xf32, #tpu.memory_space<vmem>>, vector<8x128xf32>
      tpu.vector_store %arg6[%c0_11, %c0_12], %12 {strides = array<i32>} : memref<8x128xf32, #tpu.memory_space<vmem>>, vector<8x128xf32>,
    } else {
    }
    %c0 = arith.constant 0 : index
    %c0_1 = arith.constant 0 : index
    %3 = vector.load %arg6[%c0, %c0_1] : memref<8x128xf32, #tpu.memory_space<vmem>>, vector<8x128xf32>
    %c0_2 = arith.constant 0 : index
    %c0_3 = arith.constant 0 : index
    %4 = vector.load %arg2[%c0_2, %c0_3] : memref<8x128xbf16, #tpu.memory_space<vmem>>, vector<8x128xbf16>
    %c0_4 = arith.constant 0 : index
    %c0_5 = arith.constant 0 : index
    %5 = vector.load %arg3[%c0_4, %c0_5] : memref<128x128xbf16, #tpu.memory_space<vmem>>, vector<128x128xbf16>
    %cst = arith.constant dense<0.000000e+00> : vector<8x128xf32>
    %6 = tpu.matmul %4, %5, %cst {dimension_numbers = #tpu.dot_dimension_numbers<[1], [0], [0], [1], [0, 0, 1, 1], [], []>} : vector<8x128xbf16>, vector<128x128xbf16>, vector<8x128xf32> -> vector<8x128xf32>
    %7 = arith.addf %3, %6 : vector<8x128xf32>
    %c0_6 = arith.constant 0 : index
    %c0_7 = arith.constant 0 : index
    %8 = vector.load %arg6[%c0_6, %c0_7] : memref<8x128xf32, #tpu.memory_space<vmem>>, vector<8x128xf32>
    tpu.vector_store %arg6[%c0_6, %c0_7], %7 {strides = array<i32>} : memref<8x128xf32, #tpu.memory_space<vmem>>, vector<8x128xf32>,
    %c0_i32_8 = arith.constant 0 : i32
    %9 = arith.cmpi eq, %arg1, %c0_i32_8 : i32
    %10 = arith.extui %9 : i1 to i32
    %c0_i32_9 = arith.constant 0 : i32
    %11 = arith.cmpi ne, %10, %c0_i32_9 : i32
    scf.if %11 {
      %c0_10 = arith.constant 0 : index
      %c0_11 = arith.constant 0 : index
      %12 = vector.load %arg6[%c0_10, %c0_11] : memref<8x128xf32, #tpu.memory_space<vmem>>, vector<8x128xf32>
      %c0_12 = arith.constant 0 : index
      %c0_13 = arith.constant 0 : index
      %13 = vector.load %arg4[%c0_12, %c0_13] : memref<1x128xf32, #tpu.memory_space<vmem>>, vector<1x128xf32>
      %14 = vector.broadcast %13 : vector<1x128xf32> to vector<8x128xf32>
      %15 = arith.addf %12, %14 : vector<8x128xf32>
      %cst_14 = arith.constant 0.000000e+00 : f32
      %16 = vector.broadcast %cst_14 : f32 to vector<8x128xf32>
      %17 = arith.maximumf %15, %16 : vector<8x128xf32>
      %c0_15 = arith.constant 0 : index
      %c0_16 = arith.constant 0 : index
      %18 = vector.load %arg5[%c0_15, %c0_16] : memref<8x128xf32, #tpu.memory_space<vmem>>, vector<8x128xf32>
      tpu.vector_store %arg5[%c0_15, %c0_16], %17 {strides = array<i32>} : memref<8x128xf32, #tpu.memory_space<vmem>>, vector<8x128xf32>,
    } else {
    }
    return
  }
  func.func @transform_0(%arg0: i32, %arg1: i32) -> (i32, i32) {
    %c0_i32 = arith.constant 0 : i32
    return %arg0, %arg1 : i32, i32
  }
  func.func @transform_1(%arg0: i32, %arg1: i32) -> (i32, i32) {
    %c0_i32 = arith.constant 0 : i32
    %c0_i32_0 = arith.constant 0 : i32
    return %arg1, %c0_i32 : i32, i32
  }
  func.func @transform_2(%arg0: i32, %arg1: i32) -> (i32, i32) {
    %c0_i32 = arith.constant 0 : i32
    %c0_i32_0 = arith.constant 0 : i32
    %c0_i32_1 = arith.constant 0 : i32
    return %c0_i32, %c0_i32_0 : i32, i32
  }
  func.func @transform_3(%arg0: i32, %arg1: i32) -> (i32, i32) {
    %c0_i32 = arith.constant 0 : i32
    %c0_i32_0 = arith.constant 0 : i32
    return %arg0, %c0_i32 : i32, i32
  }
}

module attributes {stable_mosaic.version = 11 : i64} {
  func.func @_fused_linear_relu_kernel(%arg0: i32, %arg1: i32, %arg2: memref<8x128xbf16, #tpu.memory_space<vmem>>, %arg3: memref<128x128xbf16, #tpu.memory_space<vmem>>, %arg4: memref<1x128xf32, #tpu.memory_space<vmem>>, %arg5: memref<8x128xf32, #tpu.memory_space<vmem>>, %arg6: memref<8x128xf32, #tpu.memory_space<vmem>>) attributes {dimension_semantics = [#tpu.dimension_semantics<parallel>, #tpu.dimension_semantics<arbitrary>], iteration_bounds = array<i64: 1, 1>, scalar_prefetch = 0 : i64, scratch_operands = 1 : i64, tpu.core_type = #tpu.core_type<tc>, window_params = [{transform_indices = @transform_0, window_bounds = array<i64: 8, 128>}, {transform_indices = @transform_1, window_bounds = array<i64: 128, 128>}, {pipeline_mode = #tpu.pipeline_mode<synchronous>, transform_indices = @transform_2, window_bounds = array<i64: 1, 128>}, {transform_indices = @transform_3, window_bounds = array<i64: 8, 128>}]} {
    %c0_i32 = arith.constant 0 : i32
    %0 = arith.cmpi eq, %arg1, %c0_i32 : i32
    %1 = arith.extui %0 : i1 to i32
    %c0_i32_0 = arith.constant 0 : i32
    %2 = arith.cmpi ne, %1, %c0_i32_0 : i32
    scf.if %2 {
      %cst_10 = arith.constant 0.000000e+00 : f32
      %12 = vector.broadcast %cst_10 : f32 to vector<8x128xf32>
      %c0_11 = arith.constant 0 : index
      %c0_12 = arith.constant 0 : index
      %13 = vector.load %arg6[%c0_11, %c0_12] : memref<8x128xf32, #tpu.memory_space<vmem>>, vector<8x128xf32>
      tpu.vector_store %arg6[%c0_11, %c0_12], %12 {strides = array<i32>} : memref<8x128xf32, #tpu.memory_space<vmem>>, vector<8x128xf32>,
    } else {
    }
    %c0 = arith.constant 0 : index
    %c0_1 = arith.constant 0 : index
    %3 = vector.load %arg6[%c0, %c0_1] : memref<8x128xf32, #tpu.memory_space<vmem>>, vector<8x128xf32>
    %c0_2 = arith.constant 0 : index
    %c0_3 = arith.constant 0 : index
    %4 = vector.load %arg2[%c0_2, %c0_3] : memref<8x128xbf16, #tpu.memory_space<vmem>>, vector<8x128xbf16>
    %c0_4 = arith.constant 0 : index
    %c0_5 = arith.constant 0 : index
    %5 = vector.load %arg3[%c0_4, %c0_5] : memref<128x128xbf16, #tpu.memory_space<vmem>>, vector<128x128xbf16>
    %cst = arith.constant dense<0.000000e+00> : vector<8x128xf32>
    %6 = tpu.matmul %4, %5, %cst {dimension_numbers = #tpu.dot_dimension_numbers<[1], [0], [0], [1], [0, 0, 1, 1], [], []>} : vector<8x128xbf16>, vector<128x128xbf16>, vector<8x128xf32> -> vector<8x128xf32>
    %7 = arith.addf %3, %6 : vector<8x128xf32>
    %c0_6 = arith.constant 0 : index
    %c0_7 = arith.constant 0 : index
    %8 = vector.load %arg6[%c0_6, %c0_7] : memref<8x128xf32, #tpu.memory_space<vmem>>, vector<8x128xf32>
    tpu.vector_store %arg6[%c0_6, %c0_7], %7 {strides = array<i32>} : memref<8x128xf32, #tpu.memory_space<vmem>>, vector<8x128xf32>,
    %c0_i32_8 = arith.constant 0 : i32
    %9 = arith.cmpi eq, %arg1, %c0_i32_8 : i32
    %10 = arith.extui %9 : i1 to i32
    %c0_i32_9 = arith.constant 0 : i32
    %11 = arith.cmpi ne, %10, %c0_i32_9 : i32
    scf.if %11 {
      %c0_10 = arith.constant 0 : index
      %c0_11 = arith.constant 0 : index
      %12 = vector.load %arg6[%c0_10, %c0_11] : memref<8x128xf32, #tpu.memory_space<vmem>>, vector<8x128xf32>
      %c0_12 = arith.constant 0 : index
      %c0_13 = arith.constant 0 : index
      %13 = vector.load %arg4[%c0_12, %c0_13] : memref<1x128xf32, #tpu.memory_space<vmem>>, vector<1x128xf32>
      %14 = vector.broadcast %13 : vector<1x128xf32> to vector<8x128xf32>
      %15 = arith.addf %12, %14 : vector<8x128xf32>
      %cst_14 = arith.constant 0.000000e+00 : f32
      %16 = vector.broadcast %cst_14 : f32 to vector<8x128xf32>
      %17 = arith.maximumf %15, %16 : vector<8x128xf32>
      %c0_15 = arith.constant 0 : index
      %c0_16 = arith.constant 0 : index
      %18 = vector.load %arg5[%c0_15, %c0_16] : memref<8x128xf32, #tpu.memory_space<vmem>>, vector<8x128xf32>
      tpu.vector_store %arg5[%c0_15, %c0_16], %17 {strides = array<i32>} : memref<8x128xf32, #tpu.memory_space<vmem>>, vector<8x128xf32>,
    } else {
    }
    return
  }
  func.func @transform_0(%arg0: i32, %arg1: i32) -> (i32, i32) {
    %c0_i32 = arith.constant 0 : i32
    return %arg0, %arg1 : i32, i32
  }
  func.func @transform_1(%arg0: i32, %arg1: i32) -> (i32, i32) {
    %c0_i32 = arith.constant 0 : i32
    %c0_i32_0 = arith.constant 0 : i32
    return %arg1, %c0_i32 : i32, i32
  }
  func.func @transform_2(%arg0: i32, %arg1: i32) -> (i32, i32) {
    %c0_i32 = arith.constant 0 : i32
    %c0_i32_0 = arith.constant 0 : i32
    %c0_i32_1 = arith.constant 0 : i32
    return %c0_i32, %c0_i32_0 : i32, i32
  }
  func.func @transform_3(%arg0: i32, %arg1: i32) -> (i32, i32) {
    %c0_i32 = arith.constant 0 : i32
    %c0_i32_0 = arith.constant 0 : i32
    return %arg0, %c0_i32 : i32, i32
  }
}

</mosaic_0001>

<llo_original>
// kernel: tpu_custom_call.1
$region0: #{tpu_custom_call.1}
  #allocation0 [shape = 'u32[]', space=smem, size = 0x4, offset = 0x4, fixed_abs, tag = 'smem constant byte address 0x4 - core index']
  #allocation1 [shape = 'u32[144,128]{1,0:T(1,128)}', space=vmem, size = 0x12000, scoped, tag = 'internal scratch']
  #allocation2 [shape = 'f32[8,128]{1,0:T(8,128)}', space=vmem, size = 0x1000, scoped, tag = 'scratch operand']
  %s0 = inlined_call_operand.hbm [shape: bf16[8,128], index: 0, kind: input, shape index: {}]
  %s1 = inlined_call_operand.hbm [shape: bf16[128,128], index: 1, kind: input, shape index: {}]
  %s2 = inlined_call_operand.hbm [shape: f32[1,128], index: 2, kind: input, shape index: {}]
  %s3 = inlined_call_operand.hbm [shape: f32[8,128], index: 3, kind: output, shape index: {}]
  %s4 = sld [smem:[#allocation0]]
  $region42: #{tpu_custom_call.1} parent=0
    _
  %s6 = ssub.s32 1, %s4
  %s7 = scalar_select 0, %s6, %s4
  $region1: #{tpu_custom_call.1} parent=0
    #allocation3 [shape = 'u8[2048]{0}', space=vmem, size = 0x800, scoped, tag = 'input window, operand 0, single buffered']
    #allocation4 [shape = 's32[1]{0}', space=sflag, size = 0x4, scoped, tag = 'scoped memory for tpu_custom_call.1']
    #allocation5 [shape = 's32[1]{0}', space=sflag, size = 0x4, scoped, tag = 'scoped memory for tpu_custom_call.1']
    #allocation6 [shape = 'u8[32768]{0}', space=vmem, size = 0x8000, scoped, tag = 'input window, operand 1, single buffered']
    #allocation7 [shape = 's32[1]{0}', space=sflag, size = 0x4, scoped, tag = 'scoped memory for tpu_custom_call.1']
    #allocation8 [shape = 'u8[512]{0}', space=vmem, size = 0x400, scoped, tag = 'input window, operand 2, single buffered']
    #allocation9 [shape = 'u8[4096]{0}', space=vmem, size = 0x1000, scoped, tag = 'output window, operand 0, single buffered']
    %8 = vsyncpa [#allocation4], 0
    %9 = vsyncpa [#allocation7], 0
    %10 = vsyncpa [#allocation5], 0
    // Predicated region
    $region2: #{tpu_custom_call.1} parent=1 // pred_check
      _
    $region3: #{tpu_custom_call.1} parent=1 // pred_check_branch
      %12 = sbr.rel (0) target = $region5
    $region4: #{tpu_custom_call.1} parent=1 // pred_region
      %s14 = ssub.s32 64, 64
      %15 = vsyncadd [#allocation4], %s14
      %s17 = sshll.u32 [#allocation3], 4
      %s18 = int_to_ptr.vmem [resolvable:$true] %s17
      %20 = dma.hbm_to_vmem [thread:$0]  %s0, 64, %s18, [#allocation4]
    $region5: #{tpu_custom_call.1} parent=1 // pred_fallthru
      _
    // Predicated region
    $region6: #{tpu_custom_call.1} parent=1 // pred_check
      _
    $region7: #{tpu_custom_call.1} parent=1 // pred_check_branch
      %22 = sbr.rel (0) target = $region9
    $region8: #{tpu_custom_call.1} parent=1 // pred_region
      %s24 = ssub.s32 1024, 1024
      %25 = vsyncadd [#allocation7], %s24
      %s26 = sshll.u32 [#allocation6], 4
      %s27 = int_to_ptr.vmem [resolvable:$true] %s26
      %32 = dma.hbm_to_vmem [thread:$0]  %s1, 1024, %s27, [#allocation7], 64, 64, 4
    $region9: #{tpu_custom_call.1} parent=1 // pred_fallthru
      _
    // Predicated region
    $region10: #{tpu_custom_call.1} parent=1 // pred_check
      _
    $region11: #{tpu_custom_call.1} parent=1 // pred_check_branch
      %34 = sbr.rel (0) target = $region13
    $region12: #{tpu_custom_call.1} parent=1 // pred_region
      %s36 = ssub.s32 16, 16
      %37 = vsyncadd [#allocation7], %s36
      %s39 = sshll.u32 [#allocation8], 4
      %s40 = int_to_ptr.vmem [resolvable:$true] %s39
      %42 = dma.hbm_to_vmem [thread:$0]  %s2, 16, %s40, [#allocation7]
    $region13: #{tpu_custom_call.1} parent=1 // pred_fallthru
      _
    // Predicated region
    $region14: #{tpu_custom_call.1} parent=1 // pred_check
      _
    $region15: #{tpu_custom_call.1} parent=1 // pred_check_branch
      %44 = sbr.rel (0) target = $region17
    $region16: #{tpu_custom_call.1} parent=1 // pred_region
      %45 = dma.done [#allocation4], 64
    $region17: #{tpu_custom_call.1} parent=1 // pred_fallthru
      _
    // Predicated region
    $region18: #{tpu_custom_call.1} parent=1 // pred_check
      _
    $region19: #{tpu_custom_call.1} parent=1 // pred_check_branch
      %47 = sbr.rel (0) target = $region21
    $region20: #{tpu_custom_call.1} parent=1 // pred_region
      %48 = dma.done [#allocation7], 1024
    $region21: #{tpu_custom_call.1} parent=1 // pred_fallthru
      _
    // Predicated region
    $region22: #{tpu_custom_call.1} parent=1 // pred_check
      _
    $region23: #{tpu_custom_call.1} parent=1 // pred_check_branch
      %50 = sbr.rel (0) target = $region25
    $region24: #{tpu_custom_call.1} parent=1 // pred_region
      %51 = dma.done [#allocation7], 16
    $region25: #{tpu_custom_call.1} parent=1 // pred_fallthru
      _
    %p53 = scmp.eq.s32.totalorder 0, 0
    // Predicated region
    $region26: #{tpu_custom_call.1} parent=1 // pred_check
      %p54 = pneg %p53
    $region27: #{tpu_custom_call.1} parent=1 // pred_check_branch
      %56 = sbr.rel (%p54) target = $region29
    $region28: #{tpu_custom_call.1} parent=1 // pred_region
      %57 = vst [vmem:[#allocation2] sm:$0xff] 0.0
    $region29: #{tpu_custom_call.1} parent=1 // pred_fallthru
      _
    %v58 = vld [vmem:[#allocation2] sm:$0xff]
    %v59 = vld [vmem:[#allocation3] sm:$0xf]
    %v60 = vld [vmem:[#allocation6] sm:$0xf]
    %v61 = vld [vmem:[#allocation6 + $0x4] sm:$0xf]
    %v62 = vld [vmem:[#allocation6 + $0x8] sm:$0xf]
    %v63 = vld [vmem:[#allocation6 + $0xc] sm:$0xf]
    %v64 = vld [vmem:[#allocation6 + $0x10] sm:$0xf]
    %v65 = vld [vmem:[#allocation6 + $0x14] sm:$0xf]
    %v66 = vld [vmem:[#allocation6 + $0x18] sm:$0xf]
    %v67 = vld [vmem:[#allocation6 + $0x1c] sm:$0xf]
    %v68 = vld [vmem:[#allocation6 + $0x20] sm:$0xf]
    %v69 = vld [vmem:[#allocation6 + $0x24] sm:$0xf]
    %v70 = vld [vmem:[#allocation6 + $0x28] sm:$0xf]
    %v71 = vld [vmem:[#allocation6 + $0x2c] sm:$0xf]
    %v72 = vld [vmem:[#allocation6 + $0x30] sm:$0xf]
    %v73 = vld [vmem:[#allocation6 + $0x34] sm:$0xf]
    %v74 = vld [vmem:[#allocation6 + $0x38] sm:$0xf]
    %v75 = vld [vmem:[#allocation6 + $0x3c] sm:$0xf]
    %v92 = vunpack.c.l.b16 %v60
    %v93 = vunpack.c.l.b16 %v61
    %v94 = vunpack.c.l.b16 %v62
    %v95 = vunpack.c.l.b16 %v63
    %v96 = vunpack.c.l.b16 %v64
    %v97 = vunpack.c.l.b16 %v65
    %v98 = vunpack.c.l.b16 %v66
    %v99 = vunpack.c.l.b16 %v67
    %v100 = vunpack.c.l.b16 %v68
    %v101 = vunpack.c.l.b16 %v69
    %v102 = vunpack.c.l.b16 %v70
    %v103 = vunpack.c.l.b16 %v71
    %v104 = vunpack.c.l.b16 %v72
    %v105 = vunpack.c.l.b16 %v73
    %v106 = vunpack.c.l.b16 %v74
    %v107 = vunpack.c.l.b16 %v75
    %v108 = vpack.c.b16 %v93, %v92
    %v109 = vpack.c.b16 %v95, %v94
    %v110 = vpack.c.b16 %v97, %v96
    %v111 = vpack.c.b16 %v99, %v98
    %v112 = vpack.c.b16 %v101, %v100
    %v113 = vpack.c.b16 %v103, %v102
    %v114 = vpack.c.b16 %v105, %v104
    %v115 = vpack.c.b16 %v107, %v106
    %124 = vmatprep.subr.bf16.mxu0 0
    %125 = vmatpush1.bf16.msra.mxu0 %v108
    %126 = vmatprep.subr.bf16.mxu0 0
    %127 = vmatpush1.bf16.msra.mxu0 %v109
    %128 = vmatprep.subr.bf16.mxu0 0
    %129 = vmatpush1.bf16.msra.mxu0 %v110
    %130 = vmatprep.subr.bf16.mxu0 0
    %131 = vmatpush1.bf16.msra.mxu0 %v111
    %132 = vmatprep.subr.bf16.mxu0 0
    %133 = vmatpush1.bf16.msra.mxu0 %v112
    %134 = vmatprep.subr.bf16.mxu0 0
    %135 = vmatpush1.bf16.msra.mxu0 %v113
    %136 = vmatprep.subr.bf16.mxu0 0
    %137 = vmatpush1.bf16.msra.mxu0 %v114
    %138 = vmatprep.subr.bf16.mxu0 0
    %139 = vmatpush1.bf16.msra.mxu0 %v115
    %140 = vmatprep.subr.bf16.mxu0 0
    %141 = vmatpush1.bf16.msra.mxu0 0
    %142 = vmatprep.subr.bf16.mxu0 0
    %143 = vmatpush1.bf16.msra.mxu0 0
    %144 = vmatprep.subr.bf16.mxu0 0
    %145 = vmatpush1.bf16.msra.mxu0 0
    %146 = vmatprep.subr.bf16.mxu0 0
    %147 = vmatpush1.bf16.msra.mxu0 0
    %148 = vmatprep.subr.bf16.mxu0 0
    %149 = vmatpush1.bf16.msra.mxu0 0
    %150 = vmatprep.subr.bf16.mxu0 0
    %151 = vmatpush1.bf16.msra.mxu0 0
    %152 = vmatprep.subr.bf16.mxu0 0
    %153 = vmatpush1.bf16.msra.mxu0 0
    %154 = vmatprep.subr.bf16.mxu0 0
    %155 = vmatpush1.bf16.msra.mxu0 0
    %156 = vmatprep.mubr.bf16.mxu0 0
    %157 = vmatmul.mubr.bf16.gmra.mrb[0].mxu0 %v59
    %v158 = vpop.f32.mrb[0].mxu0
    %v159 = vadd.f32 0.0, %v158
    %v160 = vpop.f32.mrb[0].mxu0
    %v161 = vpop.f32.mrb[0].mxu0
    %v162 = vpop.f32.mrb[0].mxu0
    %163 = vdwg.mxu0
    %v164 = vadd.f32 %v58, %v159
    %165 = vst [vmem:[#allocation2] sm:$0xff] %v164
    // Predicated region
    $region30: #{tpu_custom_call.1} parent=1 // pred_check
      %p166 = pneg %p53
    $region31: #{tpu_custom_call.1} parent=1 // pred_check_branch
      %168 = sbr.rel (%p166) target = $region33
    $region32: #{tpu_custom_call.1} parent=1 // pred_region
      %v169 = vld [vmem:[#allocation2] sm:$0xff]
      %v170 = vld [vmem:[#allocation8] sm:$0x1]
      %v172 = vlaneseq
      %v173 = vshrl.u32 %v172, 7
      %v174 = vsub.s32 0, %v173
      %v175 = vrot.slane %v170, %v174
      %v177 = vadd.f32 %v169, %v175
      %v178 = vmax.f32 %v177, 0.0
      %179 = vst [vmem:[#allocation9] sm:$0xff] %v178
    $region33: #{tpu_custom_call.1} parent=1 // pred_fallthru
      _
    // Predicated region
    $region34: #{tpu_custom_call.1} parent=1 // pred_check
      _
    $region35: #{tpu_custom_call.1} parent=1 // pred_check_branch
      %181 = sbr.rel (0) target = $region37
    $region36: #{tpu_custom_call.1} parent=1 // pred_region
      %s183 = ssub.s32 128, 128
      %184 = vsyncadd [#allocation5], %s183
      %s186 = sshll.u32 [#allocation9], 4
      %s187 = int_to_ptr.vmem [resolvable:$true] %s186
      %189 = dma.vmem_to_hbm [thread:$0]  %s187, 128, %s3, [#allocation5]
    $region37: #{tpu_custom_call.1} parent=1 // pred_fallthru
      _
    // Predicated region
    $region38: #{tpu_custom_call.1} parent=1 // pred_check
      _
    $region39: #{tpu_custom_call.1} parent=1 // pred_check_branch
      %191 = sbr.rel (0) target = $region41
    $region40: #{tpu_custom_call.1} parent=1 // pred_region
      %192 = dma.done [#allocation5], 128
    $region41: #{tpu_custom_call.1} parent=1 // pred_fallthru
      _
    %193 = vsyncpa [#allocation4], 1
    %194 = vsyncpa [#allocation7], 1
    %195 = vsyncpa [#allocation5], 1

// kernel: tpu_custom_call.1
$region0: #{tpu_custom_call.1}
  #allocation0 [shape = 'u32[]', space=smem, size = 0x4, offset = 0x4, fixed_abs, tag = 'smem constant byte address 0x4 - core index']
  #allocation1 [shape = 'u32[144,128]{1,0:T(1,128)}', space=vmem, size = 0x12000, scoped, tag = 'internal scratch']
  #allocation2 [shape = 'f32[8,128]{1,0:T(8,128)}', space=vmem, size = 0x1000, scoped, tag = 'scratch operand']
  %s0 = inlined_call_operand.hbm [shape: bf16[8,128], index: 0, kind: input, shape index: {}]
  %s1 = inlined_call_operand.hbm [shape: bf16[128,128], index: 1, kind: input, shape index: {}]
  %s2 = inlined_call_operand.hbm [shape: f32[1,128], index: 2, kind: input, shape index: {}]
  %s3 = inlined_call_operand.hbm [shape: f32[8,128], index: 3, kind: output, shape index: {}]
  %s4 = sld [smem:[#allocation0]]
  $region42: #{tpu_custom_call.1} parent=0
    _
  %s6 = ssub.s32 1, %s4
  %s7 = scalar_select 0, %s6, %s4
  $region1: #{tpu_custom_call.1} parent=0
    #allocation3 [shape = 'u8[2048]{0}', space=vmem, size = 0x800, scoped, tag = 'input window, operand 0, single buffered']
    #allocation4 [shape = 's32[1]{0}', space=sflag, size = 0x4, scoped, tag = 'scoped memory for tpu_custom_call.1']
    #allocation5 [shape = 's32[1]{0}', space=sflag, size = 0x4, scoped, tag = 'scoped memory for tpu_custom_call.1']
    #allocation6 [shape = 'u8[32768]{0}', space=vmem, size = 0x8000, scoped, tag = 'input window, operand 1, single buffered']
    #allocation7 [shape = 's32[1]{0}', space=sflag, size = 0x4, scoped, tag = 'scoped memory for tpu_custom_call.1']
    #allocation8 [shape = 'u8[512]{0}', space=vmem, size = 0x400, scoped, tag = 'input window, operand 2, single buffered']
    #allocation9 [shape = 'u8[4096]{0}', space=vmem, size = 0x1000, scoped, tag = 'output window, operand 0, single buffered']
    %8 = vsyncpa [#allocation4], 0
    %9 = vsyncpa [#allocation7], 0
    %10 = vsyncpa [#allocation5], 0
    // Predicated region
    $region2: #{tpu_custom_call.1} parent=1 // pred_check
      _
    $region3: #{tpu_custom_call.1} parent=1 // pred_check_branch
      %12 = sbr.rel (0) target = $region5
    $region4: #{tpu_custom_call.1} parent=1 // pred_region
      %s14 = ssub.s32 64, 64
      %15 = vsyncadd [#allocation4], %s14
      %s17 = sshll.u32 [#allocation3], 4
      %s18 = int_to_ptr.vmem [resolvable:$true] %s17
      %20 = dma.hbm_to_vmem [thread:$0]  %s0, 64, %s18, [#allocation4]
    $region5: #{tpu_custom_call.1} parent=1 // pred_fallthru
      _
    // Predicated region
    $region6: #{tpu_custom_call.1} parent=1 // pred_check
      _
    $region7: #{tpu_custom_call.1} parent=1 // pred_check_branch
      %22 = sbr.rel (0) target = $region9
    $region8: #{tpu_custom_call.1} parent=1 // pred_region
      %s24 = ssub.s32 1024, 1024
      %25 = vsyncadd [#allocation7], %s24
      %s26 = sshll.u32 [#allocation6], 4
      %s27 = int_to_ptr.vmem [resolvable:$true] %s26
      %32 = dma.hbm_to_vmem [thread:$0]  %s1, 1024, %s27, [#allocation7], 64, 64, 4
    $region9: #{tpu_custom_call.1} parent=1 // pred_fallthru
      _
    // Predicated region
    $region10: #{tpu_custom_call.1} parent=1 // pred_check
      _
    $region11: #{tpu_custom_call.1} parent=1 // pred_check_branch
      %34 = sbr.rel (0) target = $region13
    $region12: #{tpu_custom_call.1} parent=1 // pred_region
      %s36 = ssub.s32 16, 16
      %37 = vsyncadd [#allocation7], %s36
      %s39 = sshll.u32 [#allocation8], 4
      %s40 = int_to_ptr.vmem [resolvable:$true] %s39
      %42 = dma.hbm_to_vmem [thread:$0]  %s2, 16, %s40, [#allocation7]
    $region13: #{tpu_custom_call.1} parent=1 // pred_fallthru
      _
    // Predicated region
    $region14: #{tpu_custom_call.1} parent=1 // pred_check
      _
    $region15: #{tpu_custom_call.1} parent=1 // pred_check_branch
      %44 = sbr.rel (0) target = $region17
    $region16: #{tpu_custom_call.1} parent=1 // pred_region
      %45 = dma.done [#allocation4], 64
    $region17: #{tpu_custom_call.1} parent=1 // pred_fallthru
      _
    // Predicated region
    $region18: #{tpu_custom_call.1} parent=1 // pred_check
      _
    $region19: #{tpu_custom_call.1} parent=1 // pred_check_branch
      %47 = sbr.rel (0) target = $region21
    $region20: #{tpu_custom_call.1} parent=1 // pred_region
      %48 = dma.done [#allocation7], 1024
    $region21: #{tpu_custom_call.1} parent=1 // pred_fallthru
      _
    // Predicated region
    $region22: #{tpu_custom_call.1} parent=1 // pred_check
      _
    $region23: #{tpu_custom_call.1} parent=1 // pred_check_branch
      %50 = sbr.rel (0) target = $region25
    $region24: #{tpu_custom_call.1} parent=1 // pred_region
      %51 = dma.done [#allocation7], 16
    $region25: #{tpu_custom_call.1} parent=1 // pred_fallthru
      _
    %p53 = scmp.eq.s32.totalorder 0, 0
    // Predicated region
    $region26: #{tpu_custom_call.1} parent=1 // pred_check
      %p54 = pneg %p53
    $region27: #{tpu_custom_call.1} parent=1 // pred_check_branch
      %56 = sbr.rel (%p54) target = $region29
    $region28: #{tpu_custom_call.1} parent=1 // pred_region
      %57 = vst [vmem:[#allocation2] sm:$0xff] 0.0
    $region29: #{tpu_custom_call.1} parent=1 // pred_fallthru
      _
    %v58 = vld [vmem:[#allocation2] sm:$0xff]
    %v59 = vld [vmem:[#allocation3] sm:$0xf]
    %v60 = vld [vmem:[#allocation6] sm:$0xf]
    %v61 = vld [vmem:[#allocation6 + $0x4] sm:$0xf]
    %v62 = vld [vmem:[#allocation6 + $0x8] sm:$0xf]
    %v63 = vld [vmem:[#allocation6 + $0xc] sm:$0xf]
    %v64 = vld [vmem:[#allocation6 + $0x10] sm:$0xf]
    %v65 = vld [vmem:[#allocation6 + $0x14] sm:$0xf]
    %v66 = vld [vmem:[#allocation6 + $0x18] sm:$0xf]
    %v67 = vld [vmem:[#allocation6 + $0x1c] sm:$0xf]
    %v68 = vld [vmem:[#allocation6 + $0x20] sm:$0xf]
    %v69 = vld [vmem:[#allocation6 + $0x24] sm:$0xf]
    %v70 = vld [vmem:[#allocation6 + $0x28] sm:$0xf]
    %v71 = vld [vmem:[#allocation6 + $0x2c] sm:$0xf]
    %v72 = vld [vmem:[#allocation6 + $0x30] sm:$0xf]
    %v73 = vld [vmem:[#allocation6 + $0x34] sm:$0xf]
    %v74 = vld [vmem:[#allocation6 + $0x38] sm:$0xf]
    %v75 = vld [vmem:[#allocation6 + $0x3c] sm:$0xf]
    %v92 = vunpack.c.l.b16 %v60
    %v93 = vunpack.c.l.b16 %v61
    %v94 = vunpack.c.l.b16 %v62
    %v95 = vunpack.c.l.b16 %v63
    %v96 = vunpack.c.l.b16 %v64
    %v97 = vunpack.c.l.b16 %v65
    %v98 = vunpack.c.l.b16 %v66
    %v99 = vunpack.c.l.b16 %v67
    %v100 = vunpack.c.l.b16 %v68
    %v101 = vunpack.c.l.b16 %v69
    %v102 = vunpack.c.l.b16 %v70
    %v103 = vunpack.c.l.b16 %v71
    %v104 = vunpack.c.l.b16 %v72
    %v105 = vunpack.c.l.b16 %v73
    %v106 = vunpack.c.l.b16 %v74
    %v107 = vunpack.c.l.b16 %v75
    %v108 = vpack.c.b16 %v93, %v92
    %v109 = vpack.c.b16 %v95, %v94
    %v110 = vpack.c.b16 %v97, %v96
    %v111 = vpack.c.b16 %v99, %v98
    %v112 = vpack.c.b16 %v101, %v100
    %v113 = vpack.c.b16 %v103, %v102
    %v114 = vpack.c.b16 %v105, %v104
    %v115 = vpack.c.b16 %v107, %v106
    %124 = vmatprep.subr.bf16.mxu0 0
    %125 = vmatpush1.bf16.msra.mxu0 %v108
    %126 = vmatprep.subr.bf16.mxu0 0
    %127 = vmatpush1.bf16.msra.mxu0 %v109
    %128 = vmatprep.subr.bf16.mxu0 0
    %129 = vmatpush1.bf16.msra.mxu0 %v110
    %130 = vmatprep.subr.bf16.mxu0 0
    %131 = vmatpush1.bf16.msra.mxu0 %v111
    %132 = vmatprep.subr.bf16.mxu0 0
    %133 = vmatpush1.bf16.msra.mxu0 %v112
    %134 = vmatprep.subr.bf16.mxu0 0
    %135 = vmatpush1.bf16.msra.mxu0 %v113
    %136 = vmatprep.subr.bf16.mxu0 0
    %137 = vmatpush1.bf16.msra.mxu0 %v114
    %138 = vmatprep.subr.bf16.mxu0 0
    %139 = vmatpush1.bf16.msra.mxu0 %v115
    %140 = vmatprep.subr.bf16.mxu0 0
    %141 = vmatpush1.bf16.msra.mxu0 0
    %142 = vmatprep.subr.bf16.mxu0 0
    %143 = vmatpush1.bf16.msra.mxu0 0
    %144 = vmatprep.subr.bf16.mxu0 0
    %145 = vmatpush1.bf16.msra.mxu0 0
    %146 = vmatprep.subr.bf16.mxu0 0
    %147 = vmatpush1.bf16.msra.mxu0 0
    %148 = vmatprep.subr.bf16.mxu0 0
    %149 = vmatpush1.bf16.msra.mxu0 0
    %150 = vmatprep.subr.bf16.mxu0 0
    %151 = vmatpush1.bf16.msra.mxu0 0
    %152 = vmatprep.subr.bf16.mxu0 0
    %153 = vmatpush1.bf16.msra.mxu0 0
    %154 = vmatprep.subr.bf16.mxu0 0
    %155 = vmatpush1.bf16.msra.mxu0 0
    %156 = vmatprep.mubr.bf16.mxu0 0
    %157 = vmatmul.mubr.bf16.gmra.mrb[0].mxu0 %v59
    %v158 = vpop.f32.mrb[0].mxu0
    %v159 = vadd.f32 0.0, %v158
    %v160 = vpop.f32.mrb[0].mxu0
    %v161 = vpop.f32.mrb[0].mxu0
    %v162 = vpop.f32.mrb[0].mxu0
    %163 = vdwg.mxu0
    %v164 = vadd.f32 %v58, %v159
    %165 = vst [vmem:[#allocation2] sm:$0xff] %v164
    // Predicated region
    $region30: #{tpu_custom_call.1} parent=1 // pred_check
      %p166 = pneg %p53
    $region31: #{tpu_custom_call.1} parent=1 // pred_check_branch
      %168 = sbr.rel (%p166) target = $region33
    $region32: #{tpu_custom_call.1} parent=1 // pred_region
      %v169 = vld [vmem:[#allocation2] sm:$0xff]
      %v170 = vld [vmem:[#allocation8] sm:$0x1]
      %v172 = vlaneseq
      %v173 = vshrl.u32 %v172, 7
      %v174 = vsub.s32 0, %v173
      %v175 = vrot.slane %v170, %v174
      %v177 = vadd.f32 %v169, %v175
      %v178 = vmax.f32 %v177, 0.0
      %179 = vst [vmem:[#allocation9] sm:$0xff] %v178
    $region33: #{tpu_custom_call.1} parent=1 // pred_fallthru
      _
    // Predicated region
    $region34: #{tpu_custom_call.1} parent=1 // pred_check
      _
    $region35: #{tpu_custom_call.1} parent=1 // pred_check_branch
      %181 = sbr.rel (0) target = $region37
    $region36: #{tpu_custom_call.1} parent=1 // pred_region
      %s183 = ssub.s32 128, 128
      %184 = vsyncadd [#allocation5], %s183
      %s186 = sshll.u32 [#allocation9], 4
      %s187 = int_to_ptr.vmem [resolvable:$true] %s186
      %189 = dma.vmem_to_hbm [thread:$0]  %s187, 128, %s3, [#allocation5]
    $region37: #{tpu_custom_call.1} parent=1 // pred_fallthru
      _
    // Predicated region
    $region38: #{tpu_custom_call.1} parent=1 // pred_check
      _
    $region39: #{tpu_custom_call.1} parent=1 // pred_check_branch
      %191 = sbr.rel (0) target = $region41
    $region40: #{tpu_custom_call.1} parent=1 // pred_region
      %192 = dma.done [#allocation5], 128
    $region41: #{tpu_custom_call.1} parent=1 // pred_fallthru
      _
    %193 = vsyncpa [#allocation4], 1
    %194 = vsyncpa [#allocation7], 1
    %195 = vsyncpa [#allocation5], 1

</llo_original>
